<compile_context>
chip_gen: v6e
topology: v6e:2x2x1
jax: 0.10.0
libtpu: 0.0.40
codegen_flags: <defaults>
</compile_context>

<pallas_src>
import jax
import jax.numpy as jnp
from jax.experimental import pallas as pl
from jax.experimental.pallas import tpu as pltpu

LANE = 128            # lane width (fast axis)
MAX_TILE_ROWS = 1024  # sublane rows per grid step -> 3*1024*128*4 B = 1.5 MiB per input
NUM_CORES = 2         # leading parallel grid axis (v7x megacore; neutral on v5e/v6e)


def _cdiv(a, b):
    return -(-a // b)


def _round_up(a, b):
    return _cdiv(a, b) * b


# ----------------------------------------------------------------------------- kernels

def _moments_kernel(x_ref, b_ref, s_ref, sq_ref, xb_ref):
    """Single fused streaming sweep: accumulate Sum(x), Sum(x^2), Sum(x*b) per coordinate.

    x_ref, b_ref          : (3, TK, 128) blocks (pads are zero in both -> contribute 0)
    s_ref, sq_ref, xb_ref : (1, 3, 8, 128) per-core resident accumulators
    """
    @pl.when(pl.program_id(1) == 0)
    def _():
        s_ref[...] = jnp.zeros_like(s_ref)
        sq_ref[...] = jnp.zeros_like(sq_ref)
        xb_ref[...] = jnp.zeros_like(xb_ref)

    c, tk, lanes = x_ref.shape
    x = x_ref[...]
    b = b_ref[...]

    def fold(v):  # (3, TK, 128) -> (3, 8, 128): pure vreg adds, no XLU, no mask
        return jnp.sum(v.reshape(c, tk // 8, 8, lanes), axis=1)

    s_ref[0] = s_ref[0] + fold(x)
    sq_ref[0] = sq_ref[0] + fold(x * x)
    xb_ref[0] = xb_ref[0] + fold(x * b)


def _normalize_kernel(n_ref, stats_ref, x_ref, o_ref):
    """(init-only) o = (x - mean) * inv_std per coordinate; pad positions written as 0.

    n_ref     : SMEM (1,) int32   -- true number of control points N
    stats_ref : SMEM (6,) f32     -- [mean0, mean1, mean2, inv_std0, inv_std1, inv_std2]
    x_ref     : (3, TK, 128) block of raw padded params
    o_ref     : (3, TK, 128) block of normalised params
    """
    i = pl.program_id(0)
    _, tk, lanes = x_ref.shape
    n = n_ref[0]
    row = jax.lax.broadcasted_iota(jnp.int32, (tk, lanes), 0)
    col = jax.lax.broadcasted_iota(jnp.int32, (tk, lanes), 1)
    valid = (i * tk + row) * lanes + col < n
    for k in range(3):
        a = (x_ref[k] - stats_ref[k]) * stats_ref[3 + k]
        o_ref[k] = jnp.where(valid, a, jnp.float32(0.0))


# ----------------------------------------------------------------------------- wrappers

def _choose_tiling(n):
    """rows (multiple of NUM_CORES*tile_rows), tile_rows (<=MAX, mult of 8), steps/core."""
    rows_needed = _cdiv(n, LANE)
    steps = max(1, _cdiv(rows_needed, NUM_CORES * MAX_TILE_ROWS))
    tile_rows = _round_up(max(1, _cdiv(rows_needed, NUM_CORES * steps)), 8)
    rows = NUM_CORES * steps * tile_rows
    return rows, tile_rows, steps


def _pack_params(control_points_list, tiling=None):
    """reshape(-1,3) + concat (as in the torch module), then repack to the lane-dense
    (3, R, 128) layout, zero-padded."""
    flat = [jnp.asarray(cp, jnp.float32).reshape(-1, 3) for cp in control_points_list]
    p = jnp.concatenate(flat, axis=0)                        # (N, 3)
    n = p.shape[0]
    if tiling is None:
        tiling = _choose_tiling(n)
    rows, _, _ = tiling
    n_pad = rows * LANE
    p = jnp.pad(p, ((0, n_pad - n), (0, 0)))                 # zero pad
    slab = jnp.transpose(p, (1, 0)).reshape(3, rows, LANE)   # (3, R, 128)
    return slab, n, tiling


def _moments(x_slab, b_slab, tiling):
    """Fused blocked pass: per-coordinate Sum(x), Sum(x^2), Sum(x*b) as (3,) each."""
    rows, tile_rows, steps = tiling
    blk = pl.BlockSpec((3, tile_rows, LANE), lambda c, i: (0, c * steps + i, 0))
    acc = pl.BlockSpec((1, 3, 8, LANE), lambda c, i: (c, 0, 0, 0))
    out_sh = jax.ShapeDtypeStruct((NUM_CORES, 3, 8, LANE), jnp.float32)
    s, sq, xb = pl.pallas_call(
        _moments_kernel,
        out_shape=(out_sh, out_sh, out_sh),
        grid_spec=pltpu.PrefetchScalarGridSpec(
            num_scalar_prefetch=0, grid=(NUM_CORES, steps),
            in_specs=[blk, blk], out_specs=(acc, acc, acc)),
        compiler_params=pltpu.CompilerParams(
            dimension_semantics=("parallel", "arbitrary")),
    )(x_slab, b_slab)
    # tiny final reduce (2*3*8*128 elements per moment) in plain JAX
    return (jnp.sum(s, axis=(0, 2, 3)),
            jnp.sum(sq, axis=(0, 2, 3)),
            jnp.sum(xb, axis=(0, 2, 3)))


def _finalize_stats(s, sq, n):
    nf = jnp.float32(n)
    mean = s / nf
    m2 = sq - nf * mean * mean                 # Sum (x - mean)^2  (moment identity)
    inv_std = jax.lax.rsqrt(m2 / (nf - 1.0))   # unbiased (ddof=1), multiply not divide
    return mean, m2, inv_std


def _normalize(slab, stats6, n, tiling):
    """(init-only) Pallas normalisation; pad positions of the output are exact zeros."""
    rows, tile_rows, _ = tiling
    grid = rows // tile_rows
    blk = pl.BlockSpec((3, tile_rows, LANE), lambda i: (0, i, 0))
    return pl.pallas_call(
        _normalize_kernel,
        out_shape=jax.ShapeDtypeStruct(slab.shape, jnp.float32),
        grid_spec=pltpu.PrefetchScalarGridSpec(
            num_scalar_prefetch=0, grid=(grid,),
            in_specs=[pl.BlockSpec(memory_space=pltpu.MemorySpace.SMEM),
                      pl.BlockSpec(memory_space=pltpu.MemorySpace.SMEM),
                      blk],
            out_specs=blk),
        compiler_params=pltpu.CompilerParams(dimension_semantics=("parallel",)),
    )(jnp.array([n], jnp.int32), stats6, slab)


class ParameterRegLoss:
    """JAX/Pallas port.  Surfaces are given as a list of control-point arrays (..., 3)."""

    def __init__(self, initial_control_points, reduce_method="mean"):
        assert reduce_method in ("mean", "sum")
        self._reduce = reduce_method
        slab, n, tiling = _pack_params(initial_control_points)
        assert n >= 2, "need >= 2 control points for unbiased (ddof=1) std"
        self._n = n
        self._tiling = tiling
        s, sq, _ = _moments(slab, slab, tiling)              # one-time init stats
        mean, _, inv_std = _finalize_stats(s, sq, n)
        stats6 = jnp.concatenate([mean, inv_std])            # (6,) 1D for SMEM
        self.initial_params = jax.lax.stop_gradient(
            _normalize(slab, stats6, n, tiling))             # (3, R, 128), zero in pad
        # one-time constants for the fused forward (pad is zero, so full-slab sums are ok)
        self._sum_b = jnp.sum(self.initial_params, axis=(1, 2))        # (3,) ~ 0
        self._sum_bb = jnp.sum(self.initial_params ** 2, axis=(1, 2))  # (3,) ~ N-1

    def __call__(self, control_points_list):
        slab, n, _ = _pack_params(control_points_list, tiling=self._tiling)
        assert n == self._n and slab.shape == self.initial_params.shape
        # single fused sweep over the new params + stored normalised init params
        s, sq, xb = _moments(slab, self.initial_params, self._tiling)
        nf = jnp.float32(n)
        mean, m2, inv_std = _finalize_stats(s, sq, n)
        # Sum_i (a - b)^2 = Sum a^2 - 2 Sum a*b + Sum b^2, with a = (x - mean) * inv_std
        sum_a2 = m2 * inv_std * inv_std                           # == (N-1) per coordinate
        sum_ab = inv_std * (xb - mean * self._sum_b)
        raw = jnp.sum(sum_a2 - 2.0 * sum_ab + self._sum_bb)
        if self._reduce == "sum":
            return raw
        return raw / (3.0 * nf)                                   # MSE 'mean' over 3*N


# ----------------------------------------------------------------------------- reference

def _ref_normalise(control_points_list):
    flat = [jnp.asarray(cp, jnp.float32).reshape(-1, 3) for cp in control_points_list]
    p = jnp.concatenate(flat, axis=0)
    p = p - jnp.mean(p, axis=0)
    p = p / jnp.std(p, axis=0, ddof=1)       # torch.Tensor.std default: unbiased
    return p


def _ref_loss(init_list, new_list):
    a = _ref_normalise(new_list)
    b = _ref_normalise(init_list)
    return jnp.mean((a - b) ** 2)


# ----------------------------------------------------------------------------- main

if __name__ == "__main__":
    key = jax.random.PRNGKey(0)
    k0, k1, k2, k3 = jax.random.split(key, 4)

    # two NURBS-like surfaces: control point grids (u, v, 3)
    init_surfaces = [
        jax.random.normal(k0, (4, 4, 3), dtype=jnp.float32) * 2.0 + 1.0,
        jax.random.normal(k1, (6, 4, 3), dtype=jnp.float32) * 0.5 - 3.0,
    ]
    new_surfaces = [
        init_surfaces[0] + 0.1 * jax.random.normal(k2, (4, 4, 3), dtype=jnp.float32),
        init_surfaces[1] + 0.1 * jax.random.normal(k3, (6, 4, 3), dtype=jnp.float32),
    ]

    loss_mod = ParameterRegLoss(init_surfaces)
    loss = jax.block_until_ready(loss_mod(new_surfaces))

    ref = jax.block_until_ready(_ref_loss(init_surfaces, new_surfaces))
    assert jnp.isfinite(loss), loss
    assert jnp.allclose(loss, ref, rtol=1e-4, atol=1e-6), (loss, ref)

    print("KERNEL_OK")
</pallas_src>

<mosaic_0001>
module attributes {stable_mosaic.version = 11 : i64} {
  func.func @_moments_kernel(%arg0: i32, %arg1: i32, %arg2: memref<3x8x128xf32, #tpu.memory_space<vmem>>, %arg3: memref<3x8x128xf32, #tpu.memory_space<vmem>>, %arg4: memref<1x3x8x128xf32, #tpu.memory_space<vmem>>, %arg5: memref<1x3x8x128xf32, #tpu.memory_space<vmem>>, %arg6: memref<1x3x8x128xf32, #tpu.memory_space<vmem>>) attributes {dimension_semantics = [#tpu.dimension_semantics<parallel>, #tpu.dimension_semantics<arbitrary>], iteration_bounds = array<i64: 2, 1>, scalar_prefetch = 0 : i64, scratch_operands = 0 : i64, tpu.core_type = #tpu.core_type<tc>, window_params = [{transform_indices = @transform_0, window_bounds = array<i64: 3, 8, 128>}, {transform_indices = @transform_1, window_bounds = array<i64: 3, 8, 128>}, {transform_indices = @transform_2, window_bounds = array<i64: 1, 3, 8, 128>}, {transform_indices = @transform_3, window_bounds = array<i64: 1, 3, 8, 128>}, {transform_indices = @transform_4, window_bounds = array<i64: 1, 3, 8, 128>}]} {
    %c0_i32 = arith.constant 0 : i32
    %0 = arith.cmpi eq, %arg1, %c0_i32 : i32
    %1 = arith.extui %0 : i1 to i32
    %c0_i32_0 = arith.constant 0 : i32
    %2 = arith.cmpi ne, %1, %c0_i32_0 : i32
    scf.if %2 {
      %cst_32 = arith.constant 0.000000e+00 : f32
      %31 = vector.broadcast %cst_32 : f32 to vector<1x3x8x128xf32>
      %c0_33 = arith.constant 0 : index
      %c0_34 = arith.constant 0 : index
      %c0_35 = arith.constant 0 : index
      %c0_36 = arith.constant 0 : index
      %32 = vector.load %arg4[%c0_33, %c0_34, %c0_35, %c0_36] : memref<1x3x8x128xf32, #tpu.memory_space<vmem>>, vector<1x3x8x128xf32>
      tpu.vector_store %arg4[%c0_33, %c0_34, %c0_35, %c0_36], %31 {strides = array<i32>} : memref<1x3x8x128xf32, #tpu.memory_space<vmem>>, vector<1x3x8x128xf32>,
      %cst_37 = arith.constant 0.000000e+00 : f32
      %33 = vector.broadcast %cst_37 : f32 to vector<1x3x8x128xf32>
      %c0_38 = arith.constant 0 : index
      %c0_39 = arith.constant 0 : index
      %c0_40 = arith.constant 0 : index
      %c0_41 = arith.constant 0 : index
      %34 = vector.load %arg5[%c0_38, %c0_39, %c0_40, %c0_41] : memref<1x3x8x128xf32, #tpu.memory_space<vmem>>, vector<1x3x8x128xf32>
      tpu.vector_store %arg5[%c0_38, %c0_39, %c0_40, %c0_41], %33 {strides = array<i32>} : memref<1x3x8x128xf32, #tpu.memory_space<vmem>>, vector<1x3x8x128xf32>,
      %cst_42 = arith.constant 0.000000e+00 : f32
      %35 = vector.broadcast %cst_42 : f32 to vector<1x3x8x128xf32>
      %c0_43 = arith.constant 0 : index
      %c0_44 = arith.constant 0 : index
      %c0_45 = arith.constant 0 : index
      %c0_46 = arith.constant 0 : index
      %36 = vector.load %arg6[%c0_43, %c0_44, %c0_45, %c0_46] : memref<1x3x8x128xf32, #tpu.memory_space<vmem>>, vector<1x3x8x128xf32>
      tpu.vector_store %arg6[%c0_43, %c0_44, %c0_45, %c0_46], %35 {strides = array<i32>} : memref<1x3x8x128xf32, #tpu.memory_space<vmem>>, vector<1x3x8x128xf32>,
    } else {
    }
    %c0 = arith.constant 0 : index
    %c0_1 = arith.constant 0 : index
    %c0_2 = arith.constant 0 : index
    %3 = vector.load %arg2[%c0, %c0_1, %c0_2] : memref<3x8x128xf32, #tpu.memory_space<vmem>>, vector<3x8x128xf32>
    %c0_3 = arith.constant 0 : index
    %c0_4 = arith.constant 0 : index
    %c0_5 = arith.constant 0 : index
    %4 = vector.load %arg3[%c0_3, %c0_4, %c0_5] : memref<3x8x128xf32, #tpu.memory_space<vmem>>, vector<3x8x128xf32>
    %c0_6 = arith.constant 0 : index
    %c0_7 = arith.constant 0 : index
    %c0_8 = arith.constant 0 : index
    %c0_9 = arith.constant 0 : index
    %5 = vector.load %arg4[%c0_6, %c0_7, %c0_8, %c0_9] : memref<1x3x8x128xf32, #tpu.memory_space<vmem>>, vector<1x3x8x128xf32>
    %6 = vector.shape_cast %5 : vector<1x3x8x128xf32> to vector<3x8x128xf32>
    %7 = vector.shape_cast %3 : vector<3x8x128xf32> to vector<3x1x8x128xf32>
    %cst = arith.constant dense<0.000000e+00> : vector<3x8x128xf32>
    %8 = vector.multi_reduction <add>, %7, %cst [1] : vector<3x1x8x128xf32> to vector<3x8x128xf32>
    %9 = arith.addf %6, %8 : vector<3x8x128xf32>
    %c0_10 = arith.constant 0 : index
    %c0_11 = arith.constant 0 : index
    %c0_12 = arith.constant 0 : index
    %c0_13 = arith.constant 0 : index
    %10 = vector.load %arg4[%c0_10, %c0_11, %c0_12, %c0_13] : memref<1x3x8x128xf32, #tpu.memory_space<vmem>>, vector<1x3x8x128xf32>
    %11 = vector.shape_cast %10 : vector<1x3x8x128xf32> to vector<3x8x128xf32>
    %12 = vector.shape_cast %9 : vector<3x8x128xf32> to vector<1x3x8x128xf32>
    tpu.vector_store %arg4[%c0_10, %c0_11, %c0_12, %c0_13], %12 {strides = array<i32>} : memref<1x3x8x128xf32, #tpu.memory_space<vmem>>, vector<1x3x8x128xf32>,
    %c0_14 = arith.constant 0 : index
    %c0_15 = arith.constant 0 : index
    %c0_16 = arith.constant 0 : index
    %c0_17 = arith.constant 0 : index
    %13 = vector.load %arg5[%c0_14, %c0_15, %c0_16, %c0_17] : memref<1x3x8x128xf32, #tpu.memory_space<vmem>>, vector<1x3x8x128xf32>
    %14 = vector.shape_cast %13 : vector<1x3x8x128xf32> to vector<3x8x128xf32>
    %15 = arith.mulf %3, %3 : vector<3x8x128xf32>
    %16 = vector.shape_cast %15 : vector<3x8x128xf32> to vector<3x1x8x128xf32>
    %cst_18 = arith.constant dense<0.000000e+00> : vector<3x8x128xf32>
    %17 = vector.multi_reduction <add>, %16, %cst_18 [1] : vector<3x1x8x128xf32> to vector<3x8x128xf32>
    %18 = arith.addf %14, %17 : vector<3x8x128xf32>
    %c0_19 = arith.constant 0 : index
    %c0_20 = arith.constant 0 : index
    %c0_21 = arith.constant 0 : index
    %c0_22 = arith.constant 0 : index
    %19 = vector.load %arg5[%c0_19, %c0_20, %c0_21, %c0_22] : memref<1x3x8x128xf32, #tpu.memory_space<vmem>>, vector<1x3x8x128xf32>
    %20 = vector.shape_cast %19 : vector<1x3x8x128xf32> to vector<3x8x128xf32>
    %21 = vector.shape_cast %18 : vector<3x8x128xf32> to vector<1x3x8x128xf32>
    tpu.vector_store %arg5[%c0_19, %c0_20, %c0_21, %c0_22], %21 {strides = array<i32>} : memref<1x3x8x128xf32, #tpu.memory_space<vmem>>, vector<1x3x8x128xf32>,
    %c0_23 = arith.constant 0 : index
    %c0_24 = arith.constant 0 : index
    %c0_25 = arith.constant 0 : index
    %c0_26 = arith.constant 0 : index
    %22 = vector.load %arg6[%c0_23, %c0_24, %c0_25, %c0_26] : memref<1x3x8x128xf32, #tpu.memory_space<vmem>>, vector<1x3x8x128xf32>
    %23 = vector.shape_cast %22 : vector<1x3x8x128xf32> to vector<3x8x128xf32>
    %24 = arith.mulf %3, %4 : vector<3x8x128xf32>
    %25 = vector.shape_cast %24 : vector<3x8x128xf32> to vector<3x1x8x128xf32>
    %cst_27 = arith.constant dense<0.000000e+00> : vector<3x8x128xf32>
    %26 = vector.multi_reduction <add>, %25, %cst_27 [1] : vector<3x1x8x128xf32> to vector<3x8x128xf32>
    %27 = arith.addf %23, %26 : vector<3x8x128xf32>
    %c0_28 = arith.constant 0 : index
    %c0_29 = arith.constant 0 : index
    %c0_30 = arith.constant 0 : index
    %c0_31 = arith.constant 0 : index
    %28 = vector.load %arg6[%c0_28, %c0_29, %c0_30, %c0_31] : memref<1x3x8x128xf32, #tpu.memory_space<vmem>>, vector<1x3x8x128xf32>
    %29 = vector.shape_cast %28 : vector<1x3x8x128xf32> to vector<3x8x128xf32>
    %30 = vector.shape_cast %27 : vector<3x8x128xf32> to vector<1x3x8x128xf32>
    tpu.vector_store %arg6[%c0_28, %c0_29, %c0_30, %c0_31], %30 {strides = array<i32>} : memref<1x3x8x128xf32, #tpu.memory_space<vmem>>, vector<1x3x8x128xf32>,
    return
  }
  func.func @transform_0(%arg0: i32, %arg1: i32) -> (i32, i32, i32) {
    %c1_i32 = arith.constant 1 : i32
    %0 = arith.muli %arg0, %c1_i32 : i32
    %1 = arith.addi %0, %arg1 : i32
    %c0_i32 = arith.constant 0 : i32
    %c0_i32_0 = arith.constant 0 : i32
    %c0_i32_1 = arith.constant 0 : i32
    return %c0_i32, %1, %c0_i32_0 : i32, i32, i32
  }
  func.func @transform_1(%arg0: i32, %arg1: i32) -> (i32, i32, i32) {
    %c1_i32 = arith.constant 1 : i32
    %0 = arith.muli %arg0, %c1_i32 : i32
    %1 = arith.addi %0, %arg1 : i32
    %c0_i32 = arith.constant 0 : i32
    %c0_i32_0 = arith.constant 0 : i32
    %c0_i32_1 = arith.constant 0 : i32
    return %c0_i32, %1, %c0_i32_0 : i32, i32, i32
  }
  func.func @transform_2(%arg0: i32, %arg1: i32) -> (i32, i32, i32, i32) {
    %c0_i32 = arith.constant 0 : i32
    %c0_i32_0 = arith.constant 0 : i32
    %c0_i32_1 = arith.constant 0 : i32
    %c0_i32_2 = arith.constant 0 : i32
    return %arg0, %c0_i32, %c0_i32_0, %c0_i32_1 : i32, i32, i32, i32
  }
  func.func @transform_3(%arg0: i32, %arg1: i32) -> (i32, i32, i32, i32) {
    %c0_i32 = arith.constant 0 : i32
    %c0_i32_0 = arith.constant 0 : i32
    %c0_i32_1 = arith.constant 0 : i32
    %c0_i32_2 = arith.constant 0 : i32
    return %arg0, %c0_i32, %c0_i32_0, %c0_i32_1 : i32, i32, i32, i32
  }
  func.func @transform_4(%arg0: i32, %arg1: i32) -> (i32, i32, i32, i32) {
    %c0_i32 = arith.constant 0 : i32
    %c0_i32_0 = arith.constant 0 : i32
    %c0_i32_1 = arith.constant 0 : i32
    %c0_i32_2 = arith.constant 0 : i32
    return %arg0, %c0_i32, %c0_i32_0, %c0_i32_1 : i32, i32, i32, i32
  }
}

</mosaic_0001>

<llo_original>
// kernel: tpu_custom_call.1
$region0: #{tpu_custom_call.1}
  #allocation0 [shape = 'u32[]', space=smem, size = 0x4, offset = 0x4, fixed_abs, tag = 'smem constant byte address 0x4 - core index']
  #allocation1 [shape = 'u32[144,128]{1,0:T(1,128)}', space=vmem, size = 0x12000, scoped, tag = 'internal scratch']
  %s0 = inlined_call_operand.hbm [shape: f32[3,16,128], index: 0, kind: input, shape index: {}]
  %s1 = inlined_call_operand.hbm [shape: f32[3,16,128], index: 1, kind: input, shape index: {}]
  %s2 = inlined_call_operand.hbm [shape: f32[2,3,8,128], index: 2, kind: output, shape index: {0}]
  %s3 = inlined_call_operand.hbm [shape: f32[2,3,8,128], index: 3, kind: output, shape index: {1}]
  %s4 = inlined_call_operand.hbm [shape: f32[2,3,8,128], index: 4, kind: output, shape index: {2}]
  %5 = xla_tuple %s2, %s3, %s4
  %s6 = sld [smem:[#allocation0]]
  $region69: #{tpu_custom_call.1} parent=0
    _
  %s8 = ssub.s32 1, %s6
  %s9 = scalar_select 0, %s8, %s6
  $region1: #{tpu_custom_call.1} parent=0
    #allocation2 [shape = 'u8[24576]{0}', space=vmem, size = 0x6000, scoped, tag = 'input window, operand 0']
    #allocation3 [shape = 's32[2]{0}', space=sflag, size = 0x8, scoped, tag = 'scoped memory for tpu_custom_call.1']
    #allocation4 [shape = 's32[2]{0}', space=sflag, size = 0x8, scoped, tag = 'scoped memory for tpu_custom_call.1']
    #allocation5 [shape = 'u8[24576]{0}', space=vmem, size = 0x6000, scoped, tag = 'input window, operand 1']
    #allocation6 [shape = 's32[2]{0}', space=sflag, size = 0x8, scoped, tag = 'scoped memory for tpu_custom_call.1']
    #allocation7 [shape = 'u8[24576]{0}', space=vmem, size = 0x6000, scoped, tag = 'output window, operand 0']
    #allocation8 [shape = 'u8[24576]{0}', space=vmem, size = 0x6000, scoped, tag = 'output window, operand 1']
    #allocation9 [shape = 's32[2]{0}', space=sflag, size = 0x8, scoped, tag = 'scoped memory for tpu_custom_call.1']
    #allocation10 [shape = 'u8[24576]{0}', space=vmem, size = 0x6000, scoped, tag = 'output window, operand 2']
    %10 = vsyncpa [#allocation3], 0
    %s11 = scalar_lea.sflag [#allocation3], 1
    %12 = vsyncpa %s11, 0
    %13 = vsyncpa [#allocation6], 0
    %s14 = scalar_lea.sflag [#allocation6], 1
    %15 = vsyncpa %s14, 0
    %16 = vsyncpa [#allocation4], 0
    %s17 = scalar_lea.sflag [#allocation4], 1
    %18 = vsyncpa %s17, 0
    %19 = vsyncpa [#allocation9], 0
    %s20 = scalar_lea.sflag [#allocation9], 1
    %21 = vsyncpa %s20, 0
    loop: start=0, step=1, limit=4
    $region2: #{tpu_custom_call.1} parent=1 // loop_pre_header
      _
    $region3: #{tpu_custom_call.1} parent=1 // loop_header
      %s23 = sphi 0, %s27
      %p24 = scmp.ge.s32.totalorder %s23, 4
      %s30 = sphi 0, %s42
      %s31 = sphi 0, %s38
      %s32 = sphi 0, %s30
      %s33 = sphi 0, %s31
      %s34 = sphi 0, %s32
      %s35 = sphi 0, %s33
      %s47 = sphi 0, %s49
      %s50 = sphi 0, %s47
      %s51 = sphi 0, %s50
      %s67 = sphi 0, %s51
      %s75 = sphi 0, %s77
      %s78 = sphi 0, %s75
      %s79 = sphi 0, %s78
      %s95 = sphi 0, %s79
      %s101 = sphi 0, %s103
      %s104 = sphi 0, %s101
      %s105 = sphi 0, %s104
      %s121 = sphi 0, %s105
      %s127 = sphi 0, %s129
      %s130 = sphi 0, %s127
      %s131 = sphi 0, %s130
      %s147 = sphi 0, %s131
      %s153 = sphi 0, %s155
      %s156 = sphi 0, %s153
      %s157 = sphi 0, %s156
      %s173 = sphi 0, %s157
    $region4: #{tpu_custom_call.1} parent=1 // loop_header_branch
      %26 = sbr.rel (%p24) target = $region8
    $region5: #{tpu_custom_call.1} parent=1 // loop_body
      %s28 = ssub.s32 %s23, 1
      %s29 = ssub.s32 %s23, 2
      %s36 = sadd.s32 1, %s31
      %p37 = scmp.ge.s32.totalorder %s36, 1
      %s38 = scalar_select %p37, 0, %s36
      %s39 = sadd.s32 1, %s30
      %s40 = scalar_select %p37, %s39, %s30
      %p41 = scmp.ge.s32.totalorder %s40, 2
      %s42 = scalar_select %p41, 0, %s40
      %s43 = sadd.s32 %s30, %s31
      %s44 = sadd.s32 %s42, %s38
      %s45 = ssub.s32 %s43, %s44
      %p46 = scmp.eq.s32.totalorder %s45, 0
      %s48 = sadd.s32 %s47, 1
      %s49 = scalar_select %p46, %s47, %s48
      %p52 = pneg %p46
      %p53 = scmp.eq.s32.totalorder %s23, 1
      %p54 = por %p52, %p53
      %p55 = scmp.ne.s32.totalorder %s47, %s50
      %p56 = scmp.eq.s32.totalorder %s23, 0
      %p57 = por %p55, %p56
      %p58 = scmp.ne.s32.totalorder %s47, %s50
      %p59 = scmp.eq.s32.totalorder %s28, 1
      %p60 = por %p58, %p59
      %p61 = scmp.ne.s32.totalorder %s50, %s51
      %p62 = scmp.eq.s32.totalorder %s28, 0
      %p63 = por %p61, %p62
      %p64 = scmp.ne.s32.totalorder %s50, %s51
      %p65 = scmp.eq.s32.totalorder %s29, 1
      %p66 = por %p64, %p65
      %p68 = scmp.ne.s32.totalorder %s51, %s67
      %p69 = scmp.eq.s32.totalorder %s29, 0
      %p70 = por %p68, %p69
      %s71 = sadd.s32 %s30, %s31
      %s72 = sadd.s32 %s42, %s38
      %s73 = ssub.s32 %s71, %s72
      %p74 = scmp.eq.s32.totalorder %s73, 0
      %s76 = sadd.s32 %s75, 1
      %s77 = scalar_select %p74, %s75, %s76
      %p80 = pneg %p74
      %p81 = scmp.eq.s32.totalorder %s23, 1
      %p82 = por %p80, %p81
      %p83 = scmp.ne.s32.totalorder %s75, %s78
      %p84 = scmp.eq.s32.totalorder %s23, 0
      %p85 = por %p83, %p84
      %p86 = scmp.ne.s32.totalorder %s75, %s78
      %p87 = scmp.eq.s32.totalorder %s28, 1
      %p88 = por %p86, %p87
      %p89 = scmp.ne.s32.totalorder %s78, %s79
      %p90 = scmp.eq.s32.totalorder %s28, 0
      %p91 = por %p89, %p90
      %p92 = scmp.ne.s32.totalorder %s78, %s79
      %p93 = scmp.eq.s32.totalorder %s29, 1
      %p94 = por %p92, %p93
      %p96 = scmp.ne.s32.totalorder %s79, %s95
      %p97 = scmp.eq.s32.totalorder %s29, 0
      %p98 = por %p96, %p97
      %s99 = ssub.s32 %s30, %s42
      %p100 = scmp.eq.s32.totalorder %s99, 0
      %s102 = sadd.s32 %s101, 1
      %s103 = scalar_select %p100, %s101, %s102
      %p106 = pneg %p100
      %p107 = scmp.eq.s32.totalorder %s23, 1
      %p108 = por %p106, %p107
      %p109 = scmp.ne.s32.totalorder %s101, %s104
      %p110 = scmp.eq.s32.totalorder %s23, 0
      %p111 = por %p109, %p110
      %p112 = scmp.ne.s32.totalorder %s101, %s104
      %p113 = scmp.eq.s32.totalorder %s28, 1
      %p114 = por %p112, %p113
      %p115 = scmp.ne.s32.totalorder %s104, %s105
      %p116 = scmp.eq.s32.totalorder %s28, 0
      %p117 = por %p115, %p116
      %p118 = scmp.ne.s32.totalorder %s104, %s105
      %p119 = scmp.eq.s32.totalorder %s29, 1
      %p120 = por %p118, %p119
      %p122 = scmp.ne.s32.totalorder %s105, %s121
      %p123 = scmp.eq.s32.totalorder %s29, 0
      %p124 = por %p122, %p123
      %s125 = ssub.s32 %s30, %s42
      %p126 = scmp.eq.s32.totalorder %s125, 0
      %s128 = sadd.s32 %s127, 1
      %s129 = scalar_select %p126, %s127, %s128
      %p132 = pneg %p126
      %p133 = scmp.eq.s32.totalorder %s23, 1
      %p134 = por %p132, %p133
      %p135 = scmp.ne.s32.totalorder %s127, %s130
      %p136 = scmp.eq.s32.totalorder %s23, 0
      %p137 = por %p135, %p136
      %p138 = scmp.ne.s32.totalorder %s127, %s130
      %p139 = scmp.eq.s32.totalorder %s28, 1
      %p140 = por %p138, %p139
      %p141 = scmp.ne.s32.totalorder %s130, %s131
      %p142 = scmp.eq.s32.totalorder %s28, 0
      %p143 = por %p141, %p142
      %p144 = scmp.ne.s32.totalorder %s130, %s131
      %p145 = scmp.eq.s32.totalorder %s29, 1
      %p146 = por %p144, %p145
      %p148 = scmp.ne.s32.totalorder %s131, %s147
      %p149 = scmp.eq.s32.totalorder %s29, 0
      %p150 = por %p148, %p149
      %s151 = ssub.s32 %s30, %s42
      %p152 = scmp.eq.s32.totalorder %s151, 0
      %s154 = sadd.s32 %s153, 1
      %s155 = scalar_select %p152, %s153, %s154
      %p158 = pneg %p152
      %p159 = scmp.eq.s32.totalorder %s23, 1
      %p160 = por %p158, %p159
      %p161 = scmp.ne.s32.totalorder %s153, %s156
      %p162 = scmp.eq.s32.totalorder %s23, 0
      %p163 = por %p161, %p162
      %p164 = scmp.ne.s32.totalorder %s153, %s156
      %p165 = scmp.eq.s32.totalorder %s28, 1
      %p166 = por %p164, %p165
      %p167 = scmp.ne.s32.totalorder %s156, %s157
      %p168 = scmp.eq.s32.totalorder %s28, 0
      %p169 = por %p167, %p168
      %p170 = scmp.ne.s32.totalorder %s156, %s157
      %p171 = scmp.eq.s32.totalorder %s29, 1
      %p172 = por %p170, %p171
      %p174 = scmp.ne.s32.totalorder %s157, %s173
      %p175 = scmp.eq.s32.totalorder %s29, 0
      %p176 = por %p174, %p175
      %p177 = scmp.le.s32.totalorder 1, %s23
      %p178 = scmp.lt.s32.totalorder %s23, 3
      %p179 = pnand %p177, %p178
      %p180 = pneg %p179
      // Predicated region
      $region9: #{tpu_custom_call.1} parent=5 // pred_check
        _
      $region10: #{tpu_custom_call.1} parent=5 // pred_check_branch
        %182 = sbr.rel (%p179) target = $region12
      $region11: #{tpu_custom_call.1} parent=5 // pred_region
        %s183 = ssub.s32 %s23, 1
      $region12: #{tpu_custom_call.1} parent=5 // pred_fallthru
        _
      %p184 = scmp.lt.s32.totalorder %s23, 2
      // Predicated region
      $region13: #{tpu_custom_call.1} parent=5 // pred_check
        %p185 = pneg %p184
      $region14: #{tpu_custom_call.1} parent=5 // pred_check_branch
        %187 = sbr.rel (%p185) target = $region16
      $region15: #{tpu_custom_call.1} parent=5 // pred_region
        // Predicated region
        $region17: #{tpu_custom_call.1} parent=15 // pred_check
          %p188 = pneg %p57
        $region18: #{tpu_custom_call.1} parent=15 // pred_check_branch
          %190 = sbr.rel (%p188) target = $region20
        $region19: #{tpu_custom_call.1} parent=15 // pred_region
          %s191 = sand.u32 %s47, 1
          %s192 = scalar_lea.sflag [#allocation3], %s191
          %s193 = sand.u32 %s47, 1
          %s194 = smul.addr %s193, 24
          %s195 = scalar_lea.vmem [#allocation2], %s194
          %s196 = sadd.s32 %s30, %s31
          %s198 = ssub.s32 384, 384
          %199 = vsyncadd %s192, %s198
          %s200 = smul.addr %s196, 128
          %s201 = scalar_lea.hbm %s0, %s200
          %s202 = sshll.u32 %s195, 4
          %s203 = int_to_ptr.vmem [resolvable:$true] %s202
          %208 = dma.hbm_to_vmem [thread:$0]  %s201, 384, %s203, %s192, 256, 128, 8
        $region20: #{tpu_custom_call.1} parent=15 // pred_fallthru
          _
        // Predicated region
        $region21: #{tpu_custom_call.1} parent=15 // pred_check
          %p209 = pneg %p85
        $region22: #{tpu_custom_call.1} parent=15 // pred_check_branch
          %211 = sbr.rel (%p209) target = $region24
        $region23: #{tpu_custom_call.1} parent=15 // pred_region
          %s212 = sand.u32 %s75, 1
          %s213 = scalar_lea.sflag [#allocation6], %s212
          %s214 = sand.u32 %s75, 1
          %s215 = smul.addr %s214, 24
          %s216 = scalar_lea.vmem [#allocation5], %s215
          %s217 = sadd.s32 %s30, %s31
          %s219 = ssub.s32 384, 384
          %220 = vsyncadd %s213, %s219
          %s221 = smul.addr %s217, 128
          %s222 = scalar_lea.hbm %s1, %s221
          %s223 = sshll.u32 %s216, 4
          %s224 = int_to_ptr.vmem [resolvable:$true] %s223
          %229 = dma.hbm_to_vmem [thread:$0]  %s222, 384, %s224, %s213, 256, 128, 8
        $region24: #{tpu_custom_call.1} parent=15 // pred_fallthru
          _
      $region16: #{tpu_custom_call.1} parent=5 // pred_fallthru
        _
      %p230 = scmp.le.s32.totalorder 1, %s23
      %p231 = scmp.lt.s32.totalorder %s23, 3
      %p232 = pnand %p230, %p231
      %p233 = pneg %p232
      // Predicated region
      $region25: #{tpu_custom_call.1} parent=5 // pred_check
        _
      $region26: #{tpu_custom_call.1} parent=5 // pred_check_branch
        %235 = sbr.rel (%p232) target = $region28
      $region27: #{tpu_custom_call.1} parent=5 // pred_region
        %s236 = ssub.s32 %s23, 1
        %s237 = sand.u32 %s50, 1
        %s238 = scalar_lea.sflag [#allocation3], %s237
        %s239 = sand.u32 %s50, 1
        %s240 = smul.addr %s239, 24
        %s241 = scalar_lea.vmem [#allocation2], %s240
        // Predicated region
        $region29: #{tpu_custom_call.1} parent=27 // pred_check
          %p242 = pneg %p63
        $region30: #{tpu_custom_call.1} parent=27 // pred_check_branch
          %244 = sbr.rel (%p242) target = $region32
        $region31: #{tpu_custom_call.1} parent=27 // pred_region
          %245 = dma.done %s238, 384
        $region32: #{tpu_custom_call.1} parent=27 // pred_fallthru
          _
        %s246 = sand.u32 %s78, 1
        %s247 = scalar_lea.sflag [#allocation6], %s246
        %s248 = sand.u32 %s78, 1
        %s249 = smul.addr %s248, 24
        %s250 = scalar_lea.vmem [#allocation5], %s249
        // Predicated region
        $region33: #{tpu_custom_call.1} parent=27 // pred_check
          %p251 = pneg %p91
        $region34: #{tpu_custom_call.1} parent=27 // pred_check_branch
          %253 = sbr.rel (%p251) target = $region36
        $region35: #{tpu_custom_call.1} parent=27 // pred_region
          %254 = dma.done %s247, 384
        $region36: #{tpu_custom_call.1} parent=27 // pred_fallthru
          _
        %s255 = sand.u32 %s50, 1
        %s256 = scalar_lea.sflag [#allocation3], %s255
        %s257 = sand.u32 %s50, 1
        %s258 = smul.addr %s257, 24
        %s259 = scalar_lea.vmem [#allocation2], %s258
        %p260 = pneg %p63
        %p261 = pneg %p60
        %s262 = sand.u32 %s78, 1
        %s263 = scalar_lea.sflag [#allocation6], %s262
        %s264 = sand.u32 %s78, 1
        %s265 = smul.addr %s264, 24
        %s266 = scalar_lea.vmem [#allocation5], %s265
        %p267 = pneg %p91
        %p268 = pneg %p88
        %p269 = pneg %p117
        %p270 = pneg %p114
        %s271 = sand.u32 %s104, 1
        %s272 = scalar_lea.sflag [#allocation4], %s271
        %s273 = sand.u32 %s104, 1
        %s274 = smul.addr %s273, 24
        %s275 = scalar_lea.vmem [#allocation7], %s274
        %p276 = pneg %p143
        %p277 = pneg %p140
        %s278 = sand.u32 %s28, 1
        %s279 = scalar_lea.sflag [#allocation9], %s278
        %s280 = sand.u32 %s130, 1
        %s281 = smul.addr %s280, 24
        %s282 = scalar_lea.vmem [#allocation8], %s281
        %p283 = pneg %p169
        %p284 = pneg %p166
        %s285 = sand.u32 %s28, 1
        %s286 = scalar_lea.sflag [#allocation9], %s285
        %s287 = sand.u32 %s156, 1
        %s288 = smul.addr %s287, 24
        %s289 = scalar_lea.vmem [#allocation10], %s288
        %s290 = sadd.s32 %s32, %s33
        %s291 = sadd.s32 %s32, %s33
        %p292 = scmp.eq.s32.totalorder %s33, 0
        // Predicated region
        $region37: #{tpu_custom_call.1} parent=27 // pred_check
          %p293 = pneg %p292
        $region38: #{tpu_custom_call.1} parent=27 // pred_check_branch
          %295 = sbr.rel (%p293) target = $region40
        $region39: #{tpu_custom_call.1} parent=27 // pred_region
          %296 = vst [vmem:[%s275] sm:$0xff] 0.0
          %297 = vst [vmem:[%s275 + $0x8] sm:$0xff] 0.0
          %298 = vst [vmem:[%s275 + $0x10] sm:$0xff] 0.0
          %299 = vst [vmem:[%s282] sm:$0xff] 0.0
          %300 = vst [vmem:[%s282 + $0x8] sm:$0xff] 0.0
          %301 = vst [vmem:[%s282 + $0x10] sm:$0xff] 0.0
          %302 = vst [vmem:[%s289] sm:$0xff] 0.0
          %303 = vst [vmem:[%s289 + $0x8] sm:$0xff] 0.0
          %304 = vst [vmem:[%s289 + $0x10] sm:$0xff] 0.0
        $region40: #{tpu_custom_call.1} parent=27 // pred_fallthru
          _
        %v305 = vld [vmem:[%s241] sm:$0xff]
        %v306 = vld [vmem:[%s241 + $0x8] sm:$0xff]
        %v307 = vld [vmem:[%s241 + $0x10] sm:$0xff]
        %v308 = vld [vmem:[%s250] sm:$0xff]
        %v309 = vld [vmem:[%s250 + $0x8] sm:$0xff]
        %v310 = vld [vmem:[%s250 + $0x10] sm:$0xff]
        %v311 = vld [vmem:[%s275] sm:$0xff]
        %v312 = vld [vmem:[%s275 + $0x8] sm:$0xff]
        %v313 = vld [vmem:[%s275 + $0x10] sm:$0xff]
        %v314 = vadd.f32 %v305, 0.0
        %v315 = vadd.f32 %v306, 0.0
        %v316 = vadd.f32 %v307, 0.0
        %v317 = vadd.f32 %v311, %v314
        %v318 = vadd.f32 %v312, %v315
        %v319 = vadd.f32 %v313, %v316
        %320 = vst [vmem:[%s275] sm:$0xff] %v317
        %321 = vst [vmem:[%s275 + $0x8] sm:$0xff] %v318
        %322 = vst [vmem:[%s275 + $0x10] sm:$0xff] %v319
        %v323 = vld [vmem:[%s282] sm:$0xff]
        %v324 = vld [vmem:[%s282 + $0x8] sm:$0xff]
        %v325 = vld [vmem:[%s282 + $0x10] sm:$0xff]
        %v326 = vmul.f32 %v305, %v305
        %v327 = vmul.f32 %v306, %v306
        %v328 = vmul.f32 %v307, %v307
        %v329 = vadd.f32 %v326, 0.0
        %v330 = vadd.f32 %v327, 0.0
        %v331 = vadd.f32 %v328, 0.0
        %v332 = vadd.f32 %v323, %v329
        %v333 = vadd.f32 %v324, %v330
        %v334 = vadd.f32 %v325, %v331
        %335 = vst [vmem:[%s282] sm:$0xff] %v332
        %336 = vst [vmem:[%s282 + $0x8] sm:$0xff] %v333
        %337 = vst [vmem:[%s282 + $0x10] sm:$0xff] %v334
        %v338 = vld [vmem:[%s289] sm:$0xff]
        %v339 = vld [vmem:[%s289 + $0x8] sm:$0xff]
        %v340 = vld [vmem:[%s289 + $0x10] sm:$0xff]
        %v341 = vmul.f32 %v305, %v308
        %v342 = vmul.f32 %v306, %v309
        %v343 = vmul.f32 %v307, %v310
        %v344 = vadd.f32 %v341, 0.0
        %v345 = vadd.f32 %v342, 0.0
        %v346 = vadd.f32 %v343, 0.0
        %v347 = vadd.f32 %v338, %v344
        %v348 = vadd.f32 %v339, %v345
        %v349 = vadd.f32 %v340, %v346
        %350 = vst [vmem:[%s289] sm:$0xff] %v347
        %351 = vst [vmem:[%s289 + $0x8] sm:$0xff] %v348
        %352 = vst [vmem:[%s289 + $0x10] sm:$0xff] %v349
        %s353 = sand.u32 %s104, 1
        %s354 = scalar_lea.sflag [#allocation4], %s353
        %s355 = sand.u32 %s104, 1
        %s356 = smul.addr %s355, 24
        %s357 = scalar_lea.vmem [#allocation7], %s356
        %s358 = sand.u32 %s28, 1
        %s359 = scalar_lea.sflag [#allocation9], %s358
        %s360 = sand.u32 %s130, 1
        %s361 = smul.addr %s360, 24
        %s362 = scalar_lea.vmem [#allocation8], %s361
        %s363 = sand.u32 %s28, 1
        %s364 = scalar_lea.sflag [#allocation9], %s363
        %s365 = sand.u32 %s156, 1
        %s366 = smul.addr %s365, 24
        %s367 = scalar_lea.vmem [#allocation10], %s366
        // Predicated region
        $region41: #{tpu_custom_call.1} parent=27 // pred_check
          %p368 = pneg %p114
        $region42: #{tpu_custom_call.1} parent=27 // pred_check_branch
          %370 = sbr.rel (%p368) target = $region44
        $region43: #{tpu_custom_call.1} parent=27 // pred_region
          %s372 = ssub.s32 384, 384
          %373 = vsyncadd %s354, %s372
          %s374 = smul.addr %s32, 3
          %s375 = smul.addr %s374, 128
          %s376 = scalar_lea.hbm %s2, %s375
          %s377 = sshll.u32 %s357, 4
          %s378 = int_to_ptr.vmem [resolvable:$true] %s377
          %383 = dma.vmem_to_hbm [thread:$0]  %s378, 384, %s376, %s354, 128, 128, 8
        $region44: #{tpu_custom_call.1} parent=27 // pred_fallthru
          _
        // Predicated region
        $region45: #{tpu_custom_call.1} parent=27 // pred_check
          %p384 = pneg %p140
        $region46: #{tpu_custom_call.1} parent=27 // pred_check_branch
          %386 = sbr.rel (%p384) target = $region48
        $region47: #{tpu_custom_call.1} parent=27 // pred_region
          %s388 = ssub.s32 384, 384
          %389 = vsyncadd %s359, %s388
          %s390 = smul.addr %s32, 3
          %s391 = smul.addr %s390, 128
          %s392 = scalar_lea.hbm %s3, %s391
          %s393 = sshll.u32 %s362, 4
          %s394 = int_to_ptr.vmem [resolvable:$true] %s393
          %399 = dma.vmem_to_hbm [thread:$0]  %s394, 384, %s392, %s359, 128, 128, 8
        $region48: #{tpu_custom_call.1} parent=27 // pred_fallthru
          _
        // Predicated region
        $region49: #{tpu_custom_call.1} parent=27 // pred_check
          %p400 = pneg %p166
        $region50: #{tpu_custom_call.1} parent=27 // pred_check_branch
          %402 = sbr.rel (%p400) target = $region52
        $region51: #{tpu_custom_call.1} parent=27 // pred_region
          %s404 = ssub.s32 384, 384
          %405 = vsyncadd %s364, %s404
          %s406 = smul.addr %s32, 3
          %s407 = smul.addr %s406, 128
          %s408 = scalar_lea.hbm %s4, %s407
          %s409 = sshll.u32 %s367, 4
          %s410 = int_to_ptr.vmem [resolvable:$true] %s409
          %415 = dma.vmem_to_hbm [thread:$0]  %s410, 384, %s408, %s364, 128, 128, 8
        $region52: #{tpu_custom_call.1} parent=27 // pred_fallthru
          _
      $region28: #{tpu_custom_call.1} parent=5 // pred_fallthru
        _
      %p416 = scmp.le.s32.totalorder 2, %s23
      // Predicated region
      $region53: #{tpu_custom_call.1} parent=5 // pred_check
        %p417 = pneg %p416
      $region54: #{tpu_custom_call.1} parent=5 // pred_check_branch
        %419 = sbr.rel (%p417) target = $region56
      $region55: #{tpu_custom_call.1} parent=5 // pred_region
        %s420 = ssub.s32 %s23, 2
        // Predicated region
        $region57: #{tpu_custom_call.1} parent=55 // pred_check
          %p421 = pneg %p120
        $region58: #{tpu_custom_call.1} parent=55 // pred_check_branch
          %423 = sbr.rel (%p421) target = $region60
        $region59: #{tpu_custom_call.1} parent=55 // pred_region
          %s424 = sand.u32 %s105, 1
          %s425 = scalar_lea.sflag [#allocation4], %s424
          %s426 = sand.u32 %s105, 1
          %s427 = smul.addr %s426, 24
          %s428 = scalar_lea.vmem [#allocation7], %s427
          %429 = dma.done %s425, 384
        $region60: #{tpu_custom_call.1} parent=55 // pred_fallthru
          _
        // Predicated region
        $region61: #{tpu_custom_call.1} parent=55 // pred_check
          %p430 = pneg %p146
        $region62: #{tpu_custom_call.1} parent=55 // pred_check_branch
          %432 = sbr.rel (%p430) target = $region64
        $region63: #{tpu_custom_call.1} parent=55 // pred_region
          %s433 = sand.u32 %s29, 1
          %s434 = scalar_lea.sflag [#allocation9], %s433
          %s435 = sand.u32 %s131, 1
          %s436 = smul.addr %s435, 24
          %s437 = scalar_lea.vmem [#allocation8], %s436
          %438 = dma.done %s434, 384
        $region64: #{tpu_custom_call.1} parent=55 // pred_fallthru
          _
        // Predicated region
        $region65: #{tpu_custom_call.1} parent=55 // pred_check
          %p439 = pneg %p172
        $region66: #{tpu_custom_call.1} parent=55 // pred_check_branch
          %441 = sbr.rel (%p439) target = $region68
        $region67: #{tpu_custom_call.1} parent=55 // pred_region
          %s442 = sand.u32 %s29, 1
          %s443 = scalar_lea.sflag [#allocation9], %s442
          %s444 = sand.u32 %s157, 1
          %s445 = smul.addr %s444, 24
          %s446 = scalar_lea.vmem [#allocation10], %s445
          %447 = dma.done %s443, 384
        $region68: #{tpu_custom_call.1} parent=55 // pred_fallthru
          _
      $region56: #{tpu_custom_call.1} parent=5 // pred_fallthru
        _
    $region6: #{tpu_custom_call.1} parent=1 // loop_footer
      %s27 = sadd.s32 1, %s23
    $region7: #{tpu_custom_call.1} parent=1 // loop_footer_branch
      %22 = sbr.rel target = $region3
    $region8: #{tpu_custom_call.1} parent=1 // loop_exit
      _
    %448 = vsyncpa [#allocation3], 1
    %s449 = scalar_lea.sflag [#allocation3], 1
    %450 = vsyncpa %s449, 1
    %451 = vsyncpa [#allocation6], 1
    %s452 = scalar_lea.sflag [#allocation6], 1
    %453 = vsyncpa %s452, 1
    %454 = vsyncpa [#allocation4], 1
    %s455 = scalar_lea.sflag [#allocation4], 1
    %456 = vsyncpa %s455, 1
    %457 = vsyncpa [#allocation9], 1
    %s458 = scalar_lea.sflag [#allocation9], 1
    %459 = vsyncpa %s458, 1

</llo_original>
